<compile_context>
chip_gen: v7x
topology: tpu7x:2x2x1
jax: 0.10.0
libtpu: 0.0.40
codegen_flags: <defaults>
</compile_context>

<pallas_src>
import jax
import jax.numpy as jnp
from jax.experimental import pallas as pl
from jax.experimental.pallas import tpu as pltpu


def _round_up(x, m):
    return (x + m - 1) // m * m


def _largest_aligned_divisor(total, cap, align):
    """Largest multiple of `align` dividing `total` that is <= cap; else `total`."""
    cap = max(align, (min(cap, total) // align) * align)
    t = cap
    while t >= align:
        if total % t == 0:
            return t
        t -= align
    return total


def gru_cell_kernel(x_ref, h_ref, hcol_ref, wi_ref, wh_ref, bi_ref, out_ref):
    tn = out_ref.shape[-1]  # 128-aligned column tile; gate slab is [r | i | n] = 3*tn

    # Two fused MXU matmuls over the gate-interleaved column slab (f32 accumulation).
    gi = jnp.dot(x_ref[...], wi_ref[...], preferred_element_type=jnp.float32) + bi_ref[...]
    gh = jnp.dot(h_ref[...], wh_ref[...], preferred_element_type=jnp.float32)

    # One sigmoid over the concatenated (tb, 2*tn) r/i pre-activation slab.
    ri = jax.nn.sigmoid(gi[:, : 2 * tn] + gh[:, : 2 * tn])
    r = ri[:, :tn]
    i = ri[:, tn:]
    n = jnp.tanh(gi[:, 2 * tn:] + r * gh[:, 2 * tn:])

    h_col = hcol_ref[...].astype(jnp.float32)
    # h' = (1-i)*n + i*h  ==  n + i*(h - n)
    out_ref[...] = (n + i * (h_col - n)).astype(out_ref.dtype)


def pack_gru_params(params, *, compute_dtype=jnp.bfloat16, block_n=256):
    """Repack per-gate weights into gate-interleaved, 128-aligned column slabs.

    Column slab j (width 3*tn) holds [W_r | W_i | W_n] columns j*tn:(j+1)*tn, so
    each grid step runs one fused matmul per operand and gate slices fall on
    128-aligned lane boundaries.  Call once and reuse (amortizes repack + cast).
    """
    K = params["w_ir"].shape[0]
    H = params["w_hr"].shape[0]
    Hp = _round_up(H, 128)                                   # lane-dense output columns
    tn = _largest_aligned_divisor(Hp, block_n, 128)
    if tn == Hp and Hp >= 256:                               # keep >=2 column tiles for
        tn = _largest_aligned_divisor(Hp, Hp // 2, 128)      # pipelining / megacore
    nj = Hp // tn

    def interleave(wr, wi_, wn, pad_rows_to=None):
        ws = []
        for w in (wr, wi_, wn):
            if pad_rows_to is not None and pad_rows_to != w.shape[0]:
                w = jnp.pad(w, ((0, pad_rows_to - w.shape[0]), (0, 0)))
            if Hp != H:
                w = jnp.pad(w, ((0, 0), (0, Hp - H)))
            ws.append(w)
        w = jnp.stack(ws, axis=1)                            # (D, 3, Hp)
        w = w.reshape(w.shape[0], 3, nj, tn).transpose(0, 2, 1, 3)
        return w.reshape(w.shape[0], nj * 3 * tn)            # (D, 3*Hp) interleaved

    return {
        "wi": interleave(params["w_ir"], params["w_ii"], params["w_in"]).astype(compute_dtype),
        "wh": interleave(params["w_hr"], params["w_hi"], params["w_hn"],
                         pad_rows_to=Hp).astype(compute_dtype),
        "bi": interleave(params["b_ir"], params["b_ii"], params["b_in"]).astype(jnp.float32),
        "K": K, "H": H, "Hp": Hp, "tn": tn, "dtype": compute_dtype,
    }


def gru_cell(x, hx, packed, *, block_b=256):
    """x: (B, input_size); hx: (B, hidden) or None; packed: from pack_gru_params."""
    wi, wh, bi = packed["wi"], packed["wh"], packed["bi"]
    K, H, Hp, tn = packed["K"], packed["H"], packed["Hp"], packed["tn"]
    dt = packed["dtype"]
    B = x.shape[0]
    nj = Hp // tn
    slab = 3 * tn

    if hx is None:
        hx = jnp.zeros((B, H), dt)
    x = x.astype(dt)
    h = hx.astype(dt)
    if Hp != H:
        h = jnp.pad(h, ((0, 0), (0, Hp - H)))

    itemsize = jnp.dtype(dt).itemsize
    b_align = 16 if itemsize == 2 else 8
    tb = _largest_aligned_divisor(B, block_b, b_align)
    nb = B // tb

    # VMEM budget: double-buffered tiles of every operand + output, with margin.
    per_step = (itemsize * (tb * K + tb * Hp + tb * tn + (K + Hp) * slab + tb * tn)
                + 4 * slab)
    vmem_need = 2 * per_step
    vmem_limit = max(32 << 20, min(int(vmem_need * 1.5) + (1 << 20), 100 << 20))

    cost = pl.CostEstimate(
        flops=2 * B * (K + Hp) * 3 * Hp,
        transcendentals=3 * B * Hp,
        bytes_accessed=int(itemsize * (B * K + 2 * B * Hp + (K + Hp) * 3 * Hp) + 4 * 3 * Hp),
    )

    grid_spec = pltpu.PrefetchScalarGridSpec(
        num_scalar_prefetch=0,
        grid=(nb, nj),
        in_specs=[
            pl.BlockSpec((tb, K),    lambda b, j: (b, 0)),   # x batch tile (full K)
            pl.BlockSpec((tb, Hp),   lambda b, j: (b, 0)),   # h batch tile (full Hp, for matmul)
            pl.BlockSpec((tb, tn),   lambda b, j: (b, j)),   # h column slab (for the blend)
            pl.BlockSpec((K, slab),  lambda b, j: (0, j)),   # packed W_i column slab
            pl.BlockSpec((Hp, slab), lambda b, j: (0, j)),   # packed W_h column slab
            pl.BlockSpec((1, slab),  lambda b, j: (0, j)),   # packed bias slab
        ],
        out_specs=pl.BlockSpec((tb, tn), lambda b, j: (b, j)),
    )

    out = pl.pallas_call(
        gru_cell_kernel,
        out_shape=jax.ShapeDtypeStruct((B, Hp), dt),
        grid_spec=grid_spec,
        compiler_params=pltpu.CompilerParams(
            dimension_semantics=("parallel", "parallel"),
            vmem_limit_bytes=vmem_limit,
        ),
        cost_estimate=cost,
    )(x, h, h, wi, wh, bi)

    return out[:, :H] if Hp != H else out


def init_params(key, input_size, hidden_size):
    """Deterministic synthetic params; Linear weights already transposed to (in, out)."""
    ks = jax.random.split(key, 9)
    s_in = 1.0 / jnp.sqrt(input_size)
    s_h = 1.0 / jnp.sqrt(hidden_size)
    return {
        "w_ir": jax.random.uniform(ks[0], (input_size, hidden_size), jnp.float32, -s_in, s_in),
        "w_ii": jax.random.uniform(ks[1], (input_size, hidden_size), jnp.float32, -s_in, s_in),
        "w_in": jax.random.uniform(ks[2], (input_size, hidden_size), jnp.float32, -s_in, s_in),
        "w_hr": jax.random.uniform(ks[3], (hidden_size, hidden_size), jnp.float32, -s_h, s_h),
        "w_hi": jax.random.uniform(ks[4], (hidden_size, hidden_size), jnp.float32, -s_h, s_h),
        "w_hn": jax.random.uniform(ks[5], (hidden_size, hidden_size), jnp.float32, -s_h, s_h),
        "b_ir": jax.random.uniform(ks[6], (1, hidden_size), jnp.float32, -s_in, s_in),
        "b_ii": jax.random.uniform(ks[7], (1, hidden_size), jnp.float32, -s_in, s_in),
        "b_in": jax.random.uniform(ks[8], (1, hidden_size), jnp.float32, -s_in, s_in),
    }


def gru_cell_ref(x, hx, p):
    r = jax.nn.sigmoid(x @ p["w_ir"] + p["b_ir"] + hx @ p["w_hr"])
    i = jax.nn.sigmoid(x @ p["w_ii"] + p["b_ii"] + hx @ p["w_hi"])
    n = jnp.tanh(x @ p["w_in"] + p["b_in"] + r * (hx @ p["w_hn"]))
    return (1.0 - i) * n + i * hx


if __name__ == "__main__":
    # Main shapes: H=256 -> two 128-wide column tiles (pipelining + megacore).
    B, INPUT, HIDDEN = 16, 128, 256

    key = jax.random.PRNGKey(0)
    kx, kh, kp = jax.random.split(key, 3)
    x = jax.random.normal(kx, (B, INPUT), jnp.float32)
    hx = jax.random.normal(kh, (B, HIDDEN), jnp.float32)
    params = init_params(kp, INPUT, HIDDEN)

    ref = gru_cell_ref(x, hx, params)
    jax.block_until_ready(ref)

    # f32 weights/activations path (tolerance covers MXU-vs-XLA f32 algorithm differences).
    packed_f32 = pack_gru_params(params, compute_dtype=jnp.float32)
    out_f32 = gru_cell(x, hx, packed_f32)
    jax.block_until_ready(out_f32)
    assert out_f32.shape == (B, HIDDEN)
    assert jnp.allclose(out_f32, ref, atol=5e-3, rtol=5e-3)

    # Default bf16 weights/activations path (f32 MXU accumulation) — loose tolerance.
    packed_bf16 = pack_gru_params(params)
    out_bf16 = gru_cell(x, hx, packed_bf16)
    jax.block_until_ready(out_bf16)
    assert out_bf16.dtype == jnp.bfloat16
    assert jnp.allclose(out_bf16.astype(jnp.float32), ref, atol=5e-2, rtol=5e-2)

    # Non-128-multiple hidden size exercises the padding path (Hp=128).
    B2, K2, H2 = 8, 48, 80
    x2 = jax.random.normal(jax.random.PRNGKey(1), (B2, K2), jnp.float32)
    h2 = jax.random.normal(jax.random.PRNGKey(2), (B2, H2), jnp.float32)
    p2 = init_params(jax.random.PRNGKey(3), K2, H2)
    out2 = gru_cell(x2, h2, pack_gru_params(p2, compute_dtype=jnp.float32))
    jax.block_until_ready(out2)
    assert out2.shape == (B2, H2)
    assert jnp.allclose(out2, gru_cell_ref(x2, h2, p2), atol=5e-3, rtol=5e-3)

    print("KERNEL_OK")
</pallas_src>

<mosaic_0001>
module attributes {stable_mosaic.version = 11 : i64} {
  func.func @gru_cell_kernel(%arg0: i32, %arg1: i32, %arg2: memref<16x128xf32, #tpu.memory_space<vmem>>, %arg3: memref<16x256xf32, #tpu.memory_space<vmem>>, %arg4: memref<16x128xf32, #tpu.memory_space<vmem>>, %arg5: memref<128x384xf32, #tpu.memory_space<vmem>>, %arg6: memref<256x384xf32, #tpu.memory_space<vmem>>, %arg7: memref<1x384xf32, #tpu.memory_space<vmem>>, %arg8: memref<16x128xf32, #tpu.memory_space<vmem>>) attributes {dimension_semantics = [#tpu.dimension_semantics<parallel>, #tpu.dimension_semantics<parallel>], iteration_bounds = array<i64: 1, 2>, scalar_prefetch = 0 : i64, scratch_operands = 0 : i64, tpu.core_type = #tpu.core_type<tc>, window_params = [{transform_indices = @transform_0, window_bounds = array<i64: 16, 128>}, {transform_indices = @transform_1, window_bounds = array<i64: 16, 256>}, {transform_indices = @transform_2, window_bounds = array<i64: 16, 128>}, {transform_indices = @transform_3, window_bounds = array<i64: 128, 384>}, {transform_indices = @transform_4, window_bounds = array<i64: 256, 384>}, {transform_indices = @transform_5, window_bounds = array<i64: 1, 384>}, {transform_indices = @transform_6, window_bounds = array<i64: 16, 128>}]} {
    %c0 = arith.constant 0 : index
    %c0_0 = arith.constant 0 : index
    %0 = vector.load %arg2[%c0, %c0_0] : memref<16x128xf32, #tpu.memory_space<vmem>>, vector<16x128xf32>
    %c0_1 = arith.constant 0 : index
    %c0_2 = arith.constant 0 : index
    %1 = vector.load %arg5[%c0_1, %c0_2] : memref<128x384xf32, #tpu.memory_space<vmem>>, vector<128x384xf32>
    %cst = arith.constant dense<0.000000e+00> : vector<16x384xf32>
    %2 = tpu.matmul %0, %1, %cst {dimension_numbers = #tpu.dot_dimension_numbers<[1], [0], [0], [1], [0, 0, 1, 1], [], []>} : vector<16x128xf32>, vector<128x384xf32>, vector<16x384xf32> -> vector<16x384xf32>
    %c0_3 = arith.constant 0 : index
    %c0_4 = arith.constant 0 : index
    %3 = vector.load %arg7[%c0_3, %c0_4] : memref<1x384xf32, #tpu.memory_space<vmem>>, vector<1x384xf32>
    %4 = vector.broadcast %3 : vector<1x384xf32> to vector<16x384xf32>
    %5 = arith.addf %2, %4 : vector<16x384xf32>
    %c0_5 = arith.constant 0 : index
    %c0_6 = arith.constant 0 : index
    %6 = vector.load %arg3[%c0_5, %c0_6] : memref<16x256xf32, #tpu.memory_space<vmem>>, vector<16x256xf32>
    %c0_7 = arith.constant 0 : index
    %c0_8 = arith.constant 0 : index
    %7 = vector.load %arg6[%c0_7, %c0_8] : memref<256x384xf32, #tpu.memory_space<vmem>>, vector<256x384xf32>
    %cst_9 = arith.constant dense<0.000000e+00> : vector<16x384xf32>
    %8 = tpu.matmul %6, %7, %cst_9 {dimension_numbers = #tpu.dot_dimension_numbers<[1], [0], [0], [1], [0, 0, 1, 1], [], []>} : vector<16x256xf32>, vector<256x384xf32>, vector<16x384xf32> -> vector<16x384xf32>
    %9 = vector.extract_strided_slice %5 {offsets = [0, 0], sizes = [16, 256], strides = [1, 1]} : vector<16x384xf32> to vector<16x256xf32>
    %10 = vector.extract_strided_slice %8 {offsets = [0, 0], sizes = [16, 256], strides = [1, 1]} : vector<16x384xf32> to vector<16x256xf32>
    %11 = arith.addf %9, %10 : vector<16x256xf32>
    %12 = arith.negf %11 : vector<16x256xf32>
    %13 = math.exp %12 : vector<16x256xf32>
    %cst_10 = arith.constant 1.000000e+00 : f32
    %14 = vector.broadcast %cst_10 : f32 to vector<16x256xf32>
    %15 = arith.addf %14, %13 : vector<16x256xf32>
    %16 = arith.divf %14, %15 : vector<16x256xf32>
    %17 = vector.extract_strided_slice %16 {offsets = [0, 0], sizes = [16, 128], strides = [1, 1]} : vector<16x256xf32> to vector<16x128xf32>
    %18 = vector.extract_strided_slice %16 {offsets = [0, 128], sizes = [16, 128], strides = [1, 1]} : vector<16x256xf32> to vector<16x128xf32>
    %19 = vector.extract_strided_slice %5 {offsets = [0, 256], sizes = [16, 128], strides = [1, 1]} : vector<16x384xf32> to vector<16x128xf32>
    %20 = vector.extract_strided_slice %8 {offsets = [0, 256], sizes = [16, 128], strides = [1, 1]} : vector<16x384xf32> to vector<16x128xf32>
    %21 = arith.mulf %17, %20 : vector<16x128xf32>
    %22 = arith.addf %19, %21 : vector<16x128xf32>
    %23 = math.tanh %22 : vector<16x128xf32>
    %c0_11 = arith.constant 0 : index
    %c0_12 = arith.constant 0 : index
    %24 = vector.load %arg4[%c0_11, %c0_12] : memref<16x128xf32, #tpu.memory_space<vmem>>, vector<16x128xf32>
    %25 = arith.subf %24, %23 : vector<16x128xf32>
    %26 = arith.mulf %18, %25 : vector<16x128xf32>
    %27 = arith.addf %23, %26 : vector<16x128xf32>
    %c0_13 = arith.constant 0 : index
    %c0_14 = arith.constant 0 : index
    %28 = vector.load %arg8[%c0_13, %c0_14] : memref<16x128xf32, #tpu.memory_space<vmem>>, vector<16x128xf32>
    tpu.vector_store %arg8[%c0_13, %c0_14], %27 {strides = array<i32>} : memref<16x128xf32, #tpu.memory_space<vmem>>, vector<16x128xf32>,
    return
  }
  func.func @transform_0(%arg0: i32, %arg1: i32) -> (i32, i32) {
    %c0_i32 = arith.constant 0 : i32
    %c0_i32_0 = arith.constant 0 : i32
    return %arg0, %c0_i32 : i32, i32
  }
  func.func @transform_1(%arg0: i32, %arg1: i32) -> (i32, i32) {
    %c0_i32 = arith.constant 0 : i32
    %c0_i32_0 = arith.constant 0 : i32
    return %arg0, %c0_i32 : i32, i32
  }
  func.func @transform_2(%arg0: i32, %arg1: i32) -> (i32, i32) {
    %c0_i32 = arith.constant 0 : i32
    return %arg0, %arg1 : i32, i32
  }
  func.func @transform_3(%arg0: i32, %arg1: i32) -> (i32, i32) {
    %c0_i32 = arith.constant 0 : i32
    %c0_i32_0 = arith.constant 0 : i32
    return %c0_i32, %arg1 : i32, i32
  }
  func.func @transform_4(%arg0: i32, %arg1: i32) -> (i32, i32) {
    %c0_i32 = arith.constant 0 : i32
    %c0_i32_0 = arith.constant 0 : i32
    return %c0_i32, %arg1 : i32, i32
  }
  func.func @transform_5(%arg0: i32, %arg1: i32) -> (i32, i32) {
    %c0_i32 = arith.constant 0 : i32
    %c0_i32_0 = arith.constant 0 : i32
    return %c0_i32, %arg1 : i32, i32
  }
  func.func @transform_6(%arg0: i32, %arg1: i32) -> (i32, i32) {
    %c0_i32 = arith.constant 0 : i32
    return %arg0, %arg1 : i32, i32
  }
}

</mosaic_0001>

<llo_original>
// kernel: tpu_custom_call.1
$region0: #{tpu_custom_call.1}
  #allocation0 [shape = 'u32[]', space=smem, size = 0x4, offset = 0x4, fixed_abs, tag = 'smem constant byte address 0x4 - core index']
  #allocation1 [shape = 'u32[144,128]{1,0:T(1,128)}', space=vmem, size = 0x12000, scoped, tag = 'internal scratch']
  %s0 = inlined_call_operand.hbm [shape: f32[16,128], index: 0, kind: input, shape index: {}]
  %s1 = inlined_call_operand.hbm [shape: f32[16,256], index: 1, kind: input, shape index: {}]
  %s2 = inlined_call_operand.hbm [shape: f32[16,256], index: 2, kind: input, shape index: {}]
  %s3 = inlined_call_operand.hbm [shape: f32[128,768], index: 3, kind: input, shape index: {}]
  %s4 = inlined_call_operand.hbm [shape: f32[256,768], index: 4, kind: input, shape index: {}]
  %s5 = inlined_call_operand.vmem [shape: f32[1,768], index: 5, kind: input, shape index: {}]
  %s6 = inlined_call_operand.hbm [shape: f32[16,256], index: 6, kind: output, shape index: {}]
  %s7 = sld [smem:[#allocation0]]
  $region77: #{tpu_custom_call.1} parent=0
    _
  %s9 = ssub.s32 1, %s7
  %s10 = scalar_select 0, %s9, %s7
  $region1: #{tpu_custom_call.1} parent=0
    #allocation2 [shape = 'u8[8192]{0}', space=vmem, size = 0x2000, scoped, tag = 'input window, operand 0, single buffered']
    #allocation3 [shape = 's32[2]{0}', space=sflag, size = 0x8, scoped, tag = 'scoped memory for tpu_custom_call.1']
    #allocation4 [shape = 's32[2]{0}', space=sflag, size = 0x8, scoped, tag = 'scoped memory for tpu_custom_call.1']
    #allocation5 [shape = 'u8[16384]{0}', space=vmem, size = 0x4000, scoped, tag = 'input window, operand 1, single buffered']
    #allocation6 [shape = 's32[1]{0}', space=sflag, size = 0x4, scoped, tag = 'scoped memory for tpu_custom_call.1']
    #allocation7 [shape = 'u8[16384]{0}', space=vmem, size = 0x4000, scoped, tag = 'input window, operand 2']
    #allocation8 [shape = 'u8[393216]{0}', space=vmem, size = 0x60000, scoped, tag = 'input window, operand 3']
    #allocation9 [shape = 'u8[786432]{0}', space=vmem, size = 0xc0000, scoped, tag = 'input window, operand 4']
    #allocation10 [shape = 'u8[16384]{0}', space=vmem, size = 0x4000, scoped, tag = 'output window, operand 0']
    %11 = vsyncpa [#allocation3], 0
    %12 = vsyncpa [#allocation6], 0
    %13 = vsyncpa [#allocation4], 0
    %s14 = scalar_lea.sflag [#allocation4], 1
    %15 = vsyncpa %s14, 0
    loop: start=0, step=1, limit=4
    $region2: #{tpu_custom_call.1} parent=1 // loop_pre_header
      _
    $region3: #{tpu_custom_call.1} parent=1 // loop_header
      %s17 = sphi 0, %s21
      %p18 = scmp.ge.s32.totalorder %s17, 4
      %s24 = sphi 0, %s36
      %s25 = sphi 0, %s32
      %s26 = sphi 0, %s24
      %s27 = sphi 0, %s25
      %s28 = sphi 0, %s26
      %s29 = sphi 0, %s27
      %s39 = sphi 0, %s41
      %s42 = sphi 0, %s39
      %s43 = sphi 0, %s42
      %s59 = sphi 0, %s43
      %s65 = sphi 0, %s67
      %s68 = sphi 0, %s65
      %s69 = sphi 0, %s68
      %s85 = sphi 0, %s69
      %s93 = sphi 0, %s95
      %s96 = sphi 0, %s93
      %s97 = sphi 0, %s96
      %s113 = sphi 0, %s97
      %s119 = sphi 0, %s121
      %s122 = sphi 0, %s119
      %s123 = sphi 0, %s122
      %s139 = sphi 0, %s123
      %s145 = sphi 0, %s147
      %s148 = sphi 0, %s145
      %s149 = sphi 0, %s148
      %s165 = sphi 0, %s149
      %s171 = sphi 0, %s173
      %s174 = sphi 0, %s171
      %s175 = sphi 0, %s174
      %s191 = sphi 0, %s175
      %s199 = sphi 0, %s201
      %s202 = sphi 0, %s199
      %s203 = sphi 0, %s202
      %s219 = sphi 0, %s203
    $region4: #{tpu_custom_call.1} parent=1 // loop_header_branch
      %20 = sbr.rel (%p18) target = $region8
    $region5: #{tpu_custom_call.1} parent=1 // loop_body
      %s22 = ssub.s32 %s17, 1
      %s23 = ssub.s32 %s17, 2
      %s30 = sadd.s32 1, %s25
      %p31 = scmp.ge.s32.totalorder %s30, 2
      %s32 = scalar_select %p31, 0, %s30
      %s33 = sadd.s32 1, %s24
      %s34 = scalar_select %p31, %s33, %s24
      %p35 = scmp.ge.s32.totalorder %s34, 1
      %s36 = scalar_select %p35, 0, %s34
      %s37 = ssub.s32 %s24, %s36
      %p38 = scmp.eq.s32.totalorder %s37, 0
      %s40 = sadd.s32 %s39, 1
      %s41 = scalar_select %p38, %s39, %s40
      %p44 = pneg %p38
      %p45 = scmp.eq.s32.totalorder %s17, 1
      %p46 = por %p44, %p45
      %p47 = scmp.ne.s32.totalorder %s39, %s42
      %p48 = scmp.eq.s32.totalorder %s17, 0
      %p49 = por %p47, %p48
      %p50 = scmp.ne.s32.totalorder %s39, %s42
      %p51 = scmp.eq.s32.totalorder %s22, 1
      %p52 = por %p50, %p51
      %p53 = scmp.ne.s32.totalorder %s42, %s43
      %p54 = scmp.eq.s32.totalorder %s22, 0
      %p55 = por %p53, %p54
      %p56 = scmp.ne.s32.totalorder %s42, %s43
      %p57 = scmp.eq.s32.totalorder %s23, 1
      %p58 = por %p56, %p57
      %p60 = scmp.ne.s32.totalorder %s43, %s59
      %p61 = scmp.eq.s32.totalorder %s23, 0
      %p62 = por %p60, %p61
      %s63 = ssub.s32 %s24, %s36
      %p64 = scmp.eq.s32.totalorder %s63, 0
      %s66 = sadd.s32 %s65, 1
      %s67 = scalar_select %p64, %s65, %s66
      %p70 = pneg %p64
      %p71 = scmp.eq.s32.totalorder %s17, 1
      %p72 = por %p70, %p71
      %p73 = scmp.ne.s32.totalorder %s65, %s68
      %p74 = scmp.eq.s32.totalorder %s17, 0
      %p75 = por %p73, %p74
      %p76 = scmp.ne.s32.totalorder %s65, %s68
      %p77 = scmp.eq.s32.totalorder %s22, 1
      %p78 = por %p76, %p77
      %p79 = scmp.ne.s32.totalorder %s68, %s69
      %p80 = scmp.eq.s32.totalorder %s22, 0
      %p81 = por %p79, %p80
      %p82 = scmp.ne.s32.totalorder %s68, %s69
      %p83 = scmp.eq.s32.totalorder %s23, 1
      %p84 = por %p82, %p83
      %p86 = scmp.ne.s32.totalorder %s69, %s85
      %p87 = scmp.eq.s32.totalorder %s23, 0
      %p88 = por %p86, %p87
      %s89 = ssub.s32 %s24, %s36
      %s90 = ssub.s32 %s25, %s32
      %s91 = sor.u32 %s89, %s90
      %p92 = scmp.eq.s32.totalorder %s91, 0
      %s94 = sadd.s32 %s93, 1
      %s95 = scalar_select %p92, %s93, %s94
      %p98 = pneg %p92
      %p99 = scmp.eq.s32.totalorder %s17, 1
      %p100 = por %p98, %p99
      %p101 = scmp.ne.s32.totalorder %s93, %s96
      %p102 = scmp.eq.s32.totalorder %s17, 0
      %p103 = por %p101, %p102
      %p104 = scmp.ne.s32.totalorder %s93, %s96
      %p105 = scmp.eq.s32.totalorder %s22, 1
      %p106 = por %p104, %p105
      %p107 = scmp.ne.s32.totalorder %s96, %s97
      %p108 = scmp.eq.s32.totalorder %s22, 0
      %p109 = por %p107, %p108
      %p110 = scmp.ne.s32.totalorder %s96, %s97
      %p111 = scmp.eq.s32.totalorder %s23, 1
      %p112 = por %p110, %p111
      %p114 = scmp.ne.s32.totalorder %s97, %s113
      %p115 = scmp.eq.s32.totalorder %s23, 0
      %p116 = por %p114, %p115
      %s117 = ssub.s32 %s25, %s32
      %p118 = scmp.eq.s32.totalorder %s117, 0
      %s120 = sadd.s32 %s119, 1
      %s121 = scalar_select %p118, %s119, %s120
      %p124 = pneg %p118
      %p125 = scmp.eq.s32.totalorder %s17, 1
      %p126 = por %p124, %p125
      %p127 = scmp.ne.s32.totalorder %s119, %s122
      %p128 = scmp.eq.s32.totalorder %s17, 0
      %p129 = por %p127, %p128
      %p130 = scmp.ne.s32.totalorder %s119, %s122
      %p131 = scmp.eq.s32.totalorder %s22, 1
      %p132 = por %p130, %p131
      %p133 = scmp.ne.s32.totalorder %s122, %s123
      %p134 = scmp.eq.s32.totalorder %s22, 0
      %p135 = por %p133, %p134
      %p136 = scmp.ne.s32.totalorder %s122, %s123
      %p137 = scmp.eq.s32.totalorder %s23, 1
      %p138 = por %p136, %p137
      %p140 = scmp.ne.s32.totalorder %s123, %s139
      %p141 = scmp.eq.s32.totalorder %s23, 0
      %p142 = por %p140, %p141
      %s143 = ssub.s32 %s25, %s32
      %p144 = scmp.eq.s32.totalorder %s143, 0
      %s146 = sadd.s32 %s145, 1
      %s147 = scalar_select %p144, %s145, %s146
      %p150 = pneg %p144
      %p151 = scmp.eq.s32.totalorder %s17, 1
      %p152 = por %p150, %p151
      %p153 = scmp.ne.s32.totalorder %s145, %s148
      %p154 = scmp.eq.s32.totalorder %s17, 0
      %p155 = por %p153, %p154
      %p156 = scmp.ne.s32.totalorder %s145, %s148
      %p157 = scmp.eq.s32.totalorder %s22, 1
      %p158 = por %p156, %p157
      %p159 = scmp.ne.s32.totalorder %s148, %s149
      %p160 = scmp.eq.s32.totalorder %s22, 0
      %p161 = por %p159, %p160
      %p162 = scmp.ne.s32.totalorder %s148, %s149
      %p163 = scmp.eq.s32.totalorder %s23, 1
      %p164 = por %p162, %p163
      %p166 = scmp.ne.s32.totalorder %s149, %s165
      %p167 = scmp.eq.s32.totalorder %s23, 0
      %p168 = por %p166, %p167
      %s169 = ssub.s32 %s25, %s32
      %p170 = scmp.eq.s32.totalorder %s169, 0
      %s172 = sadd.s32 %s171, 1
      %s173 = scalar_select %p170, %s171, %s172
      %p176 = pneg %p170
      %p177 = scmp.eq.s32.totalorder %s17, 1
      %p178 = por %p176, %p177
      %p179 = scmp.ne.s32.totalorder %s171, %s174
      %p180 = scmp.eq.s32.totalorder %s17, 0
      %p181 = por %p179, %p180
      %p182 = scmp.ne.s32.totalorder %s171, %s174
      %p183 = scmp.eq.s32.totalorder %s22, 1
      %p184 = por %p182, %p183
      %p185 = scmp.ne.s32.totalorder %s174, %s175
      %p186 = scmp.eq.s32.totalorder %s22, 0
      %p187 = por %p185, %p186
      %p188 = scmp.ne.s32.totalorder %s174, %s175
      %p189 = scmp.eq.s32.totalorder %s23, 1
      %p190 = por %p188, %p189
      %p192 = scmp.ne.s32.totalorder %s175, %s191
      %p193 = scmp.eq.s32.totalorder %s23, 0
      %p194 = por %p192, %p193
      %s195 = ssub.s32 %s24, %s36
      %s196 = ssub.s32 %s25, %s32
      %s197 = sor.u32 %s195, %s196
      %p198 = scmp.eq.s32.totalorder %s197, 0
      %s200 = sadd.s32 %s199, 1
      %s201 = scalar_select %p198, %s199, %s200
      %p204 = pneg %p198
      %p205 = scmp.eq.s32.totalorder %s17, 1
      %p206 = por %p204, %p205
      %p207 = scmp.ne.s32.totalorder %s199, %s202
      %p208 = scmp.eq.s32.totalorder %s17, 0
      %p209 = por %p207, %p208
      %p210 = scmp.ne.s32.totalorder %s199, %s202
      %p211 = scmp.eq.s32.totalorder %s22, 1
      %p212 = por %p210, %p211
      %p213 = scmp.ne.s32.totalorder %s202, %s203
      %p214 = scmp.eq.s32.totalorder %s22, 0
      %p215 = por %p213, %p214
      %p216 = scmp.ne.s32.totalorder %s202, %s203
      %p217 = scmp.eq.s32.totalorder %s23, 1
      %p218 = por %p216, %p217
      %p220 = scmp.ne.s32.totalorder %s203, %s219
      %p221 = scmp.eq.s32.totalorder %s23, 0
      %p222 = por %p220, %p221
      %p223 = scmp.le.s32.totalorder 1, %s17
      %p224 = scmp.lt.s32.totalorder %s17, 3
      %p225 = pnand %p223, %p224
      %p226 = pneg %p225
      // Predicated region
      $region9: #{tpu_custom_call.1} parent=5 // pred_check
        _
      $region10: #{tpu_custom_call.1} parent=5 // pred_check_branch
        %228 = sbr.rel (%p225) target = $region12
      $region11: #{tpu_custom_call.1} parent=5 // pred_region
        %s229 = ssub.s32 %s17, 1
        // Predicated region
        $region13: #{tpu_custom_call.1} parent=11 // pred_check
          %p230 = pneg %p55
        $region14: #{tpu_custom_call.1} parent=11 // pred_check_branch
          %232 = sbr.rel (%p230) target = $region16
        $region15: #{tpu_custom_call.1} parent=11 // pred_region
          %s233 = smul.u32 2, %s26
          %s235 = ssub.s32 256, 256
          %236 = vsyncadd [#allocation3], %s235
          %s237 = smul.addr %s233, 128
          %s238 = scalar_lea.hbm %s0, %s237
          %s239 = sshll.u32 [#allocation2], 4
          %s240 = int_to_ptr.vmem [resolvable:$true] %s239
          %245 = dma.hbm_to_vmem [thread:$0]  %s238, 256, %s240, [#allocation3], 128, 128, 8
        $region16: #{tpu_custom_call.1} parent=11 // pred_fallthru
          _
        // Predicated region
        $region17: #{tpu_custom_call.1} parent=11 // pred_check
          %p246 = pneg %p81
        $region18: #{tpu_custom_call.1} parent=11 // pred_check_branch
          %248 = sbr.rel (%p246) target = $region20
        $region19: #{tpu_custom_call.1} parent=11 // pred_region
          %s249 = smul.u32 2, %s26
          %s251 = ssub.s32 512, 512
          %252 = vsyncadd [#allocation6], %s251
          %s253 = smul.addr %s249, 2
          %s254 = smul.addr %s253, 128
          %s255 = scalar_lea.hbm %s1, %s254
          %s256 = sshll.u32 [#allocation5], 4
          %s257 = int_to_ptr.vmem [resolvable:$true] %s256
          %262 = dma.hbm_to_vmem [thread:$0]  %s255, 512, %s257, [#allocation6], 256, 256, 16
        $region20: #{tpu_custom_call.1} parent=11 // pred_fallthru
          _
      $region12: #{tpu_custom_call.1} parent=5 // pred_fallthru
        _
      %p263 = scmp.lt.s32.totalorder %s17, 2
      // Predicated region
      $region21: #{tpu_custom_call.1} parent=5 // pred_check
        %p264 = pneg %p263
      $region22: #{tpu_custom_call.1} parent=5 // pred_check_branch
        %266 = sbr.rel (%p264) target = $region24
      $region23: #{tpu_custom_call.1} parent=5 // pred_region
        // Predicated region
        $region25: #{tpu_custom_call.1} parent=23 // pred_check
          %p267 = pneg %p103
        $region26: #{tpu_custom_call.1} parent=23 // pred_check_branch
          %269 = sbr.rel (%p267) target = $region28
        $region27: #{tpu_custom_call.1} parent=23 // pred_region
          %s270 = sand.u32 %s17, 1
          %s271 = scalar_lea.sflag [#allocation3], %s270
          %s272 = sand.u32 %s93, 1
          %s273 = smul.addr %s272, 16
          %s274 = scalar_lea.vmem [#allocation7], %s273
          %s275 = smul.u32 2, %s24
          %s277 = ssub.s32 256, 256
          %278 = vsyncadd %s271, %s277
          %s279 = smul.addr %s275, 2
          %s280 = sadd.s32 %s25, %s279
          %s281 = smul.addr %s280, 128
          %s282 = scalar_lea.hbm %s2, %s281
          %s283 = sshll.u32 %s274, 4
          %s284 = int_to_ptr.vmem [resolvable:$true] %s283
          %289 = dma.hbm_to_vmem [thread:$0]  %s282, 256, %s284, %s271, 256, 128, 8
        $region28: #{tpu_custom_call.1} parent=23 // pred_fallthru
          _
        // Predicated region
        $region29: #{tpu_custom_call.1} parent=23 // pred_check
          %p290 = pneg %p129
        $region30: #{tpu_custom_call.1} parent=23 // pred_check_branch
          %292 = sbr.rel (%p290) target = $region32
        $region31: #{tpu_custom_call.1} parent=23 // pred_region
          %s293 = sand.u32 %s17, 1
          %s294 = scalar_lea.sflag [#allocation3], %s293
          %s295 = sand.u32 %s119, 1
          %s296 = smul.addr %s295, 384
          %s297 = scalar_lea.vmem [#allocation8], %s296
          %s298 = smul.u32 3, %s25
          %s300 = ssub.s32 6144, 6144
          %301 = vsyncadd %s294, %s300
          %s302 = smul.addr %s298, 128
          %s303 = scalar_lea.hbm %s3, %s302
          %s304 = sshll.u32 %s297, 4
          %s305 = int_to_ptr.vmem [resolvable:$true] %s304
          %310 = dma.hbm_to_vmem [thread:$0]  %s303, 6144, %s305, %s294, 768, 384, 24
        $region32: #{tpu_custom_call.1} parent=23 // pred_fallthru
          _
        // Predicated region
        $region33: #{tpu_custom_call.1} parent=23 // pred_check
          %p311 = pneg %p155
        $region34: #{tpu_custom_call.1} parent=23 // pred_check_branch
          %313 = sbr.rel (%p311) target = $region36
        $region35: #{tpu_custom_call.1} parent=23 // pred_region
          %s314 = sand.u32 %s17, 1
          %s315 = scalar_lea.sflag [#allocation3], %s314
          %s316 = sand.u32 %s145, 1
          %s317 = smul.addr %s316, 768
          %s318 = scalar_lea.vmem [#allocation9], %s317
          %s319 = smul.u32 3, %s25
          %s321 = ssub.s32 12288, 12288
          %322 = vsyncadd %s315, %s321
          %s323 = smul.addr %s319, 128
          %s324 = scalar_lea.hbm %s4, %s323
          %s325 = sshll.u32 %s318, 4
          %s326 = int_to_ptr.vmem [resolvable:$true] %s325
          %331 = dma.hbm_to_vmem [thread:$0]  %s324, 12288, %s326, %s315, 768, 384, 24
        $region36: #{tpu_custom_call.1} parent=23 // pred_fallthru
          _
        // Predicated region
        $region37: #{tpu_custom_call.1} parent=23 // pred_check
          %p332 = pneg %p181
        $region38: #{tpu_custom_call.1} parent=23 // pred_check_branch
          %334 = sbr.rel (%p332) target = $region40
        $region39: #{tpu_custom_call.1} parent=23 // pred_region
          %s335 = smul.u32 3, %s25
          %p336 = scmp.lt.s32.totalorder %s335, 5
          %s337 = scalar_select %p336, %s335, 5
          %s338 = scalar_lea.vmem %s5, %s337
          %s339 = smul.u32 3, %s25
        $region40: #{tpu_custom_call.1} parent=23 // pred_fallthru
          _
      $region24: #{tpu_custom_call.1} parent=5 // pred_fallthru
        _
      %p340 = scmp.le.s32.totalorder 1, %s17
      %p341 = scmp.lt.s32.totalorder %s17, 3
      %p342 = pnand %p340, %p341
      %p343 = pneg %p342
      // Predicated region
      $region41: #{tpu_custom_call.1} parent=5 // pred_check
        _
      $region42: #{tpu_custom_call.1} parent=5 // pred_check_branch
        %345 = sbr.rel (%p342) target = $region44
      $region43: #{tpu_custom_call.1} parent=5 // pred_region
        %s346 = ssub.s32 %s17, 1
        // Predicated region
        $region45: #{tpu_custom_call.1} parent=43 // pred_check
          %p347 = pneg %p55
        $region46: #{tpu_custom_call.1} parent=43 // pred_check_branch
          %349 = sbr.rel (%p347) target = $region48
        $region47: #{tpu_custom_call.1} parent=43 // pred_region
          %350 = dma.done [#allocation3], 256
        $region48: #{tpu_custom_call.1} parent=43 // pred_fallthru
          _
        // Predicated region
        $region49: #{tpu_custom_call.1} parent=43 // pred_check
          %p351 = pneg %p81
        $region50: #{tpu_custom_call.1} parent=43 // pred_check_branch
          %353 = sbr.rel (%p351) target = $region52
        $region51: #{tpu_custom_call.1} parent=43 // pred_region
          %354 = dma.done [#allocation6], 512
        $region52: #{tpu_custom_call.1} parent=43 // pred_fallthru
          _
        %s355 = sand.u32 %s22, 1
        %s356 = scalar_lea.sflag [#allocation3], %s355
        %s357 = sand.u32 %s96, 1
        %s358 = smul.addr %s357, 16
        %s359 = scalar_lea.vmem [#allocation7], %s358
        // Predicated region
        $region53: #{tpu_custom_call.1} parent=43 // pred_check
          %p360 = pneg %p109
        $region54: #{tpu_custom_call.1} parent=43 // pred_check_branch
          %362 = sbr.rel (%p360) target = $region56
        $region55: #{tpu_custom_call.1} parent=43 // pred_region
          %363 = dma.done %s356, 256
        $region56: #{tpu_custom_call.1} parent=43 // pred_fallthru
          _
        %s364 = sand.u32 %s22, 1
        %s365 = scalar_lea.sflag [#allocation3], %s364
        %s366 = sand.u32 %s122, 1
        %s367 = smul.addr %s366, 384
        %s368 = scalar_lea.vmem [#allocation8], %s367
        // Predicated region
        $region57: #{tpu_custom_call.1} parent=43 // pred_check
          %p369 = pneg %p135
        $region58: #{tpu_custom_call.1} parent=43 // pred_check_branch
          %371 = sbr.rel (%p369) target = $region60
        $region59: #{tpu_custom_call.1} parent=43 // pred_region
          %372 = dma.done %s365, 6144
        $region60: #{tpu_custom_call.1} parent=43 // pred_fallthru
          _
        %s373 = sand.u32 %s22, 1
        %s374 = scalar_lea.sflag [#allocation3], %s373
        %s375 = sand.u32 %s148, 1
        %s376 = smul.addr %s375, 768
        %s377 = scalar_lea.vmem [#allocation9], %s376
        // Predicated region
        $region61: #{tpu_custom_call.1} parent=43 // pred_check
          %p378 = pneg %p161
        $region62: #{tpu_custom_call.1} parent=43 // pred_check_branch
          %380 = sbr.rel (%p378) target = $region64
        $region63: #{tpu_custom_call.1} parent=43 // pred_region
          %381 = dma.done %s374, 12288
        $region64: #{tpu_custom_call.1} parent=43 // pred_fallthru
          _
        %p382 = pneg %p55
        %p383 = pneg %p52
        %p384 = pneg %p81
        %p385 = pneg %p78
        %s386 = sand.u32 %s22, 1
        %s387 = scalar_lea.sflag [#allocation3], %s386
        %s388 = sand.u32 %s96, 1
        %s389 = smul.addr %s388, 16
        %s390 = scalar_lea.vmem [#allocation7], %s389
        %p391 = pneg %p109
        %p392 = pneg %p106
        %s393 = sand.u32 %s22, 1
        %s394 = scalar_lea.sflag [#allocation3], %s393
        %s395 = sand.u32 %s122, 1
        %s396 = smul.addr %s395, 384
        %s397 = scalar_lea.vmem [#allocation8], %s396
        %p398 = pneg %p135
        %p399 = pneg %p132
        %s400 = sand.u32 %s22, 1
        %s401 = scalar_lea.sflag [#allocation3], %s400
        %s402 = sand.u32 %s148, 1
        %s403 = smul.addr %s402, 768
        %s404 = scalar_lea.vmem [#allocation9], %s403
        %p405 = pneg %p161
        %p406 = pneg %p158
        %s407 = smul.u32 3, %s27
        %p408 = scmp.lt.s32.totalorder %s407, 5
        %s409 = scalar_select %p408, %s407, 5
        %s410 = scalar_lea.vmem %s5, %s409
        %p411 = pneg %p187
        %p412 = pneg %p184
        %p413 = pneg %p215
        %p414 = pneg %p212
        %s415 = sand.u32 %s202, 1
        %s416 = scalar_lea.sflag [#allocation4], %s415
        %s417 = sand.u32 %s202, 1
        %s418 = smul.addr %s417, 16
        %s419 = scalar_lea.vmem [#allocation10], %s418
        %s420 = smul.u32 2, %s26
        %s421 = smul.u32 2, %s26
        %s422 = smul.u32 2, %s26
        %s423 = smul.u32 3, %s27
        %s424 = smul.u32 3, %s27
        %s425 = smul.u32 3, %s27
        %p426 = scmp.lt.s32.totalorder %s425, 5
        %s427 = scalar_select %p426, %s425, 5
        %s428 = scalar_lea.vmem %s5, %s427
        %s429 = smul.u32 3, %s27
        %s430 = smul.u32 2, %s26
        %v431 = vld [vmem:[#allocation2] sm:$0xff]
        %v432 = vld [vmem:[#allocation2 + $0x8] sm:$0xff]
        %v433 = vld [vmem:[%s368] sm:$0xff]
        %v434 = vld [vmem:[%s368 + $0x8] sm:$0xff]
        %v435 = vld [vmem:[%s368 + $0x10] sm:$0xff]
        %v436 = vld [vmem:[%s368 + $0x18] sm:$0xff]
        %v437 = vld [vmem:[%s368 + $0x20] sm:$0xff]
        %v438 = vld [vmem:[%s368 + $0x28] sm:$0xff]
        %v439 = vld [vmem:[%s368 + $0x30] sm:$0xff]
        %v440 = vld [vmem:[%s368 + $0x38] sm:$0xff]
        %v441 = vld [vmem:[%s368 + $0x40] sm:$0xff]
        %v442 = vld [vmem:[%s368 + $0x48] sm:$0xff]
        %v443 = vld [vmem:[%s368 + $0x50] sm:$0xff]
        %v444 = vld [vmem:[%s368 + $0x58] sm:$0xff]
        %v445 = vld [vmem:[%s368 + $0x60] sm:$0xff]
        %v446 = vld [vmem:[%s368 + $0x68] sm:$0xff]
        %v447 = vld [vmem:[%s368 + $0x70] sm:$0xff]
        %v448 = vld [vmem:[%s368 + $0x78] sm:$0xff]
        %v449 = vld [vmem:[%s368 + $0x80] sm:$0xff]
        %v450 = vld [vmem:[%s368 + $0x88] sm:$0xff]
        %v451 = vld [vmem:[%s368 + $0x90] sm:$0xff]
        %v452 = vld [vmem:[%s368 + $0x98] sm:$0xff]
        %v453 = vld [vmem:[%s368 + $0xa0] sm:$0xff]
        %v454 = vld [vmem:[%s368 + $0xa8] sm:$0xff]
        %v455 = vld [vmem:[%s368 + $0xb0] sm:$0xff]
        %v456 = vld [vmem:[%s368 + $0xb8] sm:$0xff]
        %v457 = vld [vmem:[%s368 + $0xc0] sm:$0xff]
        %v458 = vld [vmem:[%s368 + $0xc8] sm:$0xff]
        %v459 = vld [vmem:[%s368 + $0xd0] sm:$0xff]
        %v460 = vld [vmem:[%s368 + $0xd8] sm:$0xff]
        %v461 = vld [vmem:[%s368 + $0xe0] sm:$0xff]
        %v462 = vld [vmem:[%s368 + $0xe8] sm:$0xff]
        %v463 = vld [vmem:[%s368 + $0xf0] sm:$0xff]
        %v464 = vld [vmem:[%s368 + $0xf8] sm:$0xff]
        %v465 = vld [vmem:[%s368 + $0x100] sm:$0xff]
        %v466 = vld [vmem:[%s368 + $0x108] sm:$0xff]
        %v467 = vld [vmem:[%s368 + $0x110] sm:$0xff]
        %v468 = vld [vmem:[%s368 + $0x118] sm:$0xff]
        %v469 = vld [vmem:[%s368 + $0x120] sm:$0xff]
        %v470 = vld [vmem:[%s368 + $0x128] sm:$0xff]
        %v471 = vld [vmem:[%s368 + $0x130] sm:$0xff]
        %v472 = vld [vmem:[%s368 + $0x138] sm:$0xff]
        %v473 = vld [vmem:[%s368 + $0x140] sm:$0xff]
        %v474 = vld [vmem:[%s368 + $0x148] sm:$0xff]
        %v475 = vld [vmem:[%s368 + $0x150] sm:$0xff]
        %v476 = vld [vmem:[%s368 + $0x158] sm:$0xff]
        %v477 = vld [vmem:[%s368 + $0x160] sm:$0xff]
        %v478 = vld [vmem:[%s368 + $0x168] sm:$0xff]
        %v479 = vld [vmem:[%s368 + $0x170] sm:$0xff]
        %v480 = vld [vmem:[%s368 + $0x178] sm:$0xff]
        %v481 = vld [vmem:[%s428] sm:$0x7]
        %v483 = vlaneseq
        %v484 = vshrl.u32 %v483, 7
        %v485 = vsub.s32 0, %v484
        %v486 = vrot.slane %v481, %v485
        %v487 = vlaneseq
        %v488 = vshrl.u32 %v487, 7
        %v489 = vsub.s32 1, %v488
        %v490 = vrot.slane %v481, %v489
        %v491 = vlaneseq
        %v492 = vshrl.u32 %v491, 7
        %v493 = vsub.s32 2, %v492
        %v494 = vrot.slane %v481, %v493
        %498 = vmatprep.subr.mxu0 %v434
        %499 = vmatpush1.msra.mxu0 %v433
        %500 = vmatprep.subr.mxu0 %v437
        %501 = vmatpush1.msra.mxu0 %v436
        %502 = vmatprep.subr.mxu0 %v440
        %503 = vmatpush1.msra.mxu0 %v439
        %504 = vmatprep.subr.mxu0 %v443
        %505 = vmatpush1.msra.mxu0 %v442
        %506 = vmatprep.subr.mxu0 %v446
        %507 = vmatpush1.msra.mxu0 %v445
        %508 = vmatprep.subr.mxu0 %v449
        %509 = vmatpush1.msra.mxu0 %v448
        %510 = vmatprep.subr.mxu0 %v452
        %511 = vmatpush1.msra.mxu0 %v451
        %512 = vmatprep.subr.mxu0 %v455
        %513 = vmatpush1.msra.mxu0 %v454
        %514 = vmatprep.subr.mxu0 %v458
        %515 = vmatpush1.msra.mxu0 %v457
        %516 = vmatprep.subr.mxu0 %v461
        %517 = vmatpush1.msra.mxu0 %v460
        %518 = vmatprep.subr.mxu0 %v464
        %519 = vmatpush1.msra.mxu0 %v463
        %520 = vmatprep.subr.mxu0 %v467
        %521 = vmatpush1.msra.mxu0 %v466
        %522 = vmatprep.subr.mxu0 %v470
        %523 = vmatpush1.msra.mxu0 %v469
        %524 = vmatprep.subr.mxu0 %v473
        %525 = vmatpush1.msra.mxu0 %v472
        %526 = vmatprep.subr.mxu0 %v476
        %527 = vmatpush1.msra.mxu0 %v475
        %528 = vmatprep.subr.mxu0 %v479
        %529 = vmatpush1.msra.mxu0 %v478
        %530 = vmatprep.subr.mxu0 0.0
        %531 = vmatpush1.msra.mxu0 0.0
        %532 = vmatprep.subr.mxu0 0.0
        %533 = vmatpush1.msra.mxu0 0.0
        %534 = vmatprep.subr.mxu0 0.0
        %535 = vmatpush1.msra.mxu0 0.0
        %536 = vmatprep.subr.mxu0 0.0
        %537 = vmatpush1.msra.mxu0 0.0
        %538 = vmatprep.subr.mxu0 0.0
        %539 = vmatpush1.msra.mxu0 0.0
        %540 = vmatprep.subr.mxu0 0.0
        %541 = vmatpush1.msra.mxu0 0.0
        %542 = vmatprep.subr.mxu0 0.0
        %543 = vmatpush1.msra.mxu0 0.0
        %544 = vmatprep.subr.mxu0 0.0
        %545 = vmatpush1.msra.mxu0 0.0
        %546 = vmatprep.subr.mxu0 0.0
        %547 = vmatpush1.msra.mxu0 0.0
        %548 = vmatprep.subr.mxu0 0.0
        %549 = vmatpush1.msra.mxu0 0.0
        %550 = vmatprep.subr.mxu0 0.0
        %551 = vmatpush1.msra.mxu0 0.0
        %552 = vmatprep.subr.mxu0 0.0
        %553 = vmatpush1.msra.mxu0 0.0
        %554 = vmatprep.subr.mxu0 0.0
        %555 = vmatpush1.msra.mxu0 0.0
        %556 = vmatprep.subr.mxu0 0.0
        %557 = vmatpush1.msra.mxu0 0.0
        %558 = vmatprep.subr.mxu0 0.0
        %559 = vmatpush1.msra.mxu0 0.0
        %560 = vmatprep.subr.mxu0 0.0
        %561 = vmatpush1.msra.mxu0 0.0
        %562 = vmatprep.mubr.f32.mxu0 0.0
        %563 = vmatmul.mubr.f32.gmra.mrb[0].mxu0 %v431
        %v564 = vpop.f32.mrb[0].mxu0
        %v565 = vadd.f32 %v486, %v564
        %v566 = vpop.f32.mrb[0].mxu0
        %v567 = vadd.f32 %v490, %v566
        %568 = vmatprep.mubr.f32.mxu0 0.0
        %569 = vmatmul.mubr.f32.gmra.mrb[0].mxu0 %v432
        %v570 = vpop.f32.mrb[0].mxu0
        %v571 = vadd.f32 %v486, %v570
        %v572 = vpop.f32.mrb[0].mxu0
        %v573 = vadd.f32 %v490, %v572
        %574 = vdwg.mxu0
        %575 = vmatprep.subr.mxu0 0.0
        %576 = vmatpush1.msra.mxu0 %v435
        %577 = vmatprep.subr.mxu0 0.0
        %578 = vmatpush1.msra.mxu0 %v438
        %579 = vmatprep.subr.mxu0 0.0
        %580 = vmatpush1.msra.mxu0 %v441
        %581 = vmatprep.subr.mxu0 0.0
        %582 = vmatpush1.msra.mxu0 %v444
        %583 = vmatprep.subr.mxu0 0.0
        %584 = vmatpush1.msra.mxu0 %v447
        %585 = vmatprep.subr.mxu0 0.0
        %586 = vmatpush1.msra.mxu0 %v450
        %587 = vmatprep.subr.mxu0 0.0
        %588 = vmatpush1.msra.mxu0 %v453
        %589 = vmatprep.subr.mxu0 0.0
        %590 = vmatpush1.msra.mxu0 %v456
        %591 = vmatprep.subr.mxu0 0.0
        %592 = vmatpush1.msra.mxu0 %v459
        %593 = vmatprep.subr.mxu0 0.0
        %594 = vmatpush1.msra.mxu0 %v462
        %595 = vmatprep.subr.mxu0 0.0
        %596 = vmatpush1.msra.mxu0 %v465
        %597 = vmatprep.subr.mxu0 0.0
        %598 = vmatpush1.msra.mxu0 %v468
        %599 = vmatprep.subr.mxu0 0.0
        %600 = vmatpush1.msra.mxu0 %v471
        %601 = vmatprep.subr.mxu0 0.0
        %602 = vmatpush1.msra.mxu0 %v474
        %603 = vmatprep.subr.mxu0 0.0
        %604 = vmatpush1.msra.mxu0 %v477
        %605 = vmatprep.subr.mxu0 0.0
        %606 = vmatpush1.msra.mxu0 %v480
        %607 = vmatprep.subr.mxu0 0.0
        %608 = vmatpush1.msra.mxu0 0.0
        %609 = vmatprep.subr.mxu0 0.0
        %610 = vmatpush1.msra.mxu0 0.0
        %611 = vmatprep.subr.mxu0 0.0
        %612 = vmatpush1.msra.mxu0 0.0
        %613 = vmatprep.subr.mxu0 0.0
        %614 = vmatpush1.msra.mxu0 0.0
        %615 = vmatprep.subr.mxu0 0.0
        %616 = vmatpush1.msra.mxu0 0.0
        %617 = vmatprep.subr.mxu0 0.0
        %618 = vmatpush1.msra.mxu0 0.0
        %619 = vmatprep.subr.mxu0 0.0
        %620 = vmatpush1.msra.mxu0 0.0
        %621 = vmatprep.subr.mxu0 0.0
        %622 = vmatpush1.msra.mxu0 0.0
        %623 = vmatprep.subr.mxu0 0.0
        %624 = vmatpush1.msra.mxu0 0.0
        %625 = vmatprep.subr.mxu0 0.0
        %626 = vmatpush1.msra.mxu0 0.0
        %627 = vmatprep.subr.mxu0 0.0
        %628 = vmatpush1.msra.mxu0 0.0
        %629 = vmatprep.subr.mxu0 0.0
        %630 = vmatpush1.msra.mxu0 0.0
        %631 = vmatprep.subr.mxu0 0.0
        %632 = vmatpush1.msra.mxu0 0.0
        %633 = vmatprep.subr.mxu0 0.0
        %634 = vmatpush1.msra.mxu0 0.0
        %635 = vmatprep.subr.mxu0 0.0
        %636 = vmatpush1.msra.mxu0 0.0
        %637 = vmatprep.subr.mxu0 0.0
        %638 = vmatpush1.msra.mxu0 0.0
        %639 = vmatprep.mubr.f32.mxu0 0.0
        %640 = vmatmul.mubr.f32.gmra.mrb[0].mxu0 %v431
        %v641 = vpop.f32.mrb[0].mxu0
        %v642 = vadd.f32 %v494, %v641
        %v643 = vpop.f32.mrb[0].mxu0
        %644 = vmatprep.mubr.f32.mxu0 0.0
        %645 = vmatmul.mubr.f32.gmra.mrb[0].mxu0 %v432
        %v646 = vpop.f32.mrb[0].mxu0
        %v647 = vadd.f32 %v494, %v646
        %v648 = vpop.f32.mrb[0].mxu0
        %649 = vdwg.mxu0
        %v650 = vld [vmem:[#allocation5] sm:$0xff]
        %v651 = vld [vmem:[#allocation5 + $0x8] sm:$0xff]
        %v652 = vld [vmem:[#allocation5 + $0x10] sm:$0xff]
        %v653 = vld [vmem:[#allocation5 + $0x18] sm:$0xff]
        %v654 = vld [vmem:[%s377] sm:$0xff]
        %v655 = vld [vmem:[%s377 + $0x8] sm:$0xff]
        %v656 = vld [vmem:[%s377 + $0x10] sm:$0xff]
        %v657 = vld [vmem:[%s377 + $0x18] sm:$0xff]
        %v658 = vld [vmem:[%s377 + $0x20] sm:$0xff]
        %v659 = vld [vmem:[%s377 + $0x28] sm:$0xff]
        %v660 = vld [vmem:[%s377 + $0x30] sm:$0xff]
        %v661 = vld [vmem:[%s377 + $0x38] sm:$0xff]
        %v662 = vld [vmem:[%s377 + $0x40] sm:$0xff]
        %v663 = vld [vmem:[%s377 + $0x48] sm:$0xff]
        %v664 = vld [vmem:[%s377 + $0x50] sm:$0xff]
        %v665 = vld [vmem:[%s377 + $0x58] sm:$0xff]
        %v666 = vld [vmem:[%s377 + $0x60] sm:$0xff]
        %v667 = vld [vmem:[%s377 + $0x68] sm:$0xff]
        %v668 = vld [vmem:[%s377 + $0x70] sm:$0xff]
        %v669 = vld [vmem:[%s377 + $0x78] sm:$0xff]
        %v670 = vld [vmem:[%s377 + $0x80] sm:$0xff]
        %v671 = vld [vmem:[%s377 + $0x88] sm:$0xff]
        %v672 = vld [vmem:[%s377 + $0x90] sm:$0xff]
        %v673 = vld [vmem:[%s377 + $0x98] sm:$0xff]
        %v674 = vld [vmem:[%s377 + $0xa0] sm:$0xff]
        %v675 = vld [vmem:[%s377 + $0xa8] sm:$0xff]
        %v676 = vld [vmem:[%s377 + $0xb0] sm:$0xff]
        %v677 = vld [vmem:[%s377 + $0xb8] sm:$0xff]
        %v678 = vld [vmem:[%s377 + $0xc0] sm:$0xff]
        %v679 = vld [vmem:[%s377 + $0xc8] sm:$0xff]
        %v680 = vld [vmem:[%s377 + $0xd0] sm:$0xff]
        %v681 = vld [vmem:[%s377 + $0xd8] sm:$0xff]
        %v682 = vld [vmem:[%s377 + $0xe0] sm:$0xff]
        %v683 = vld [vmem:[%s377 + $0xe8] sm:$0xff]
        %v684 = vld [vmem:[%s377 + $0xf0] sm:$0xff]
        %v685 = vld [vmem:[%s377 + $0xf8] sm:$0xff]
        %v686 = vld [vmem:[%s377 + $0x100] sm:$0xff]
        %v687 = vld [vmem:[%s377 + $0x108] sm:$0xff]
        %v688 = vld [vmem:[%s377 + $0x110] sm:$0xff]
        %v689 = vld [vmem:[%s377 + $0x118] sm:$0xff]
        %v690 = vld [vmem:[%s377 + $0x120] sm:$0xff]
        %v691 = vld [vmem:[%s377 + $0x128] sm:$0xff]
        %v692 = vld [vmem:[%s377 + $0x130] sm:$0xff]
        %v693 = vld [vmem:[%s377 + $0x138] sm:$0xff]
        %v694 = vld [vmem:[%s377 + $0x140] sm:$0xff]
        %v695 = vld [vmem:[%s377 + $0x148] sm:$0xff]
        %v696 = vld [vmem:[%s377 + $0x150] sm:$0xff]
        %v697 = vld [vmem:[%s377 + $0x158] sm:$0xff]
        %v698 = vld [vmem:[%s377 + $0x160] sm:$0xff]
        %v699 = vld [vmem:[%s377 + $0x168] sm:$0xff]
        %v700 = vld [vmem:[%s377 + $0x170] sm:$0xff]
        %v701 = vld [vmem:[%s377 + $0x178] sm:$0xff]
        %v702 = vld [vmem:[%s377 + $0x180] sm:$0xff]
        %v703 = vld [vmem:[%s377 + $0x188] sm:$0xff]
        %v704 = vld [vmem:[%s377 + $0x190] sm:$0xff]
        %v705 = vld [vmem:[%s377 + $0x198] sm:$0xff]
        %v706 = vld [vmem:[%s377 + $0x1a0] sm:$0xff]
        %v707 = vld [vmem:[%s377 + $0x1a8] sm:$0xff]
        %v708 = vld [vmem:[%s377 + $0x1b0] sm:$0xff]
        %v709 = vld [vmem:[%s377 + $0x1b8] sm:$0xff]
        %v710 = vld [vmem:[%s377 + $0x1c0] sm:$0xff]
        %v711 = vld [vmem:[%s377 + $0x1c8] sm:$0xff]
        %v712 = vld [vmem:[%s377 + $0x1d0] sm:$0xff]
        %v713 = vld [vmem:[%s377 + $0x1d8] sm:$0xff]
        %v714 = vld [vmem:[%s377 + $0x1e0] sm:$0xff]
        %v715 = vld [vmem:[%s377 + $0x1e8] sm:$0xff]
        %v716 = vld [vmem:[%s377 + $0x1f0] sm:$0xff]
        %v717 = vld [vmem:[%s377 + $0x1f8] sm:$0xff]
        %v718 = vld [vmem:[%s377 + $0x200] sm:$0xff]
        %v719 = vld [vmem:[%s377 + $0x208] sm:$0xff]
        %v720 = vld [vmem:[%s377 + $0x210] sm:$0xff]
        %v721 = vld [vmem:[%s377 + $0x218] sm:$0xff]
        %v722 = vld [vmem:[%s377 + $0x220] sm:$0xff]
        %v723 = vld [vmem:[%s377 + $0x228] sm:$0xff]
        %v724 = vld [vmem:[%s377 + $0x230] sm:$0xff]
        %v725 = vld [vmem:[%s377 + $0x238] sm:$0xff]
        %v726 = vld [vmem:[%s377 + $0x240] sm:$0xff]
        %v727 = vld [vmem:[%s377 + $0x248] sm:$0xff]
        %v728 = vld [vmem:[%s377 + $0x250] sm:$0xff]
        %v729 = vld [vmem:[%s377 + $0x258] sm:$0xff]
        %v730 = vld [vmem:[%s377 + $0x260] sm:$0xff]
        %v731 = vld [vmem:[%s377 + $0x268] sm:$0xff]
        %v732 = vld [vmem:[%s377 + $0x270] sm:$0xff]
        %v733 = vld [vmem:[%s377 + $0x278] sm:$0xff]
        %v734 = vld [vmem:[%s377 + $0x280] sm:$0xff]
        %v735 = vld [vmem:[%s377 + $0x288] sm:$0xff]
        %v736 = vld [vmem:[%s377 + $0x290] sm:$0xff]
        %v737 = vld [vmem:[%s377 + $0x298] sm:$0xff]
        %v738 = vld [vmem:[%s377 + $0x2a0] sm:$0xff]
        %v739 = vld [vmem:[%s377 + $0x2a8] sm:$0xff]
        %v740 = vld [vmem:[%s377 + $0x2b0] sm:$0xff]
        %v741 = vld [vmem:[%s377 + $0x2b8] sm:$0xff]
        %v742 = vld [vmem:[%s377 + $0x2c0] sm:$0xff]
        %v743 = vld [vmem:[%s377 + $0x2c8] sm:$0xff]
        %v744 = vld [vmem:[%s377 + $0x2d0] sm:$0xff]
        %v745 = vld [vmem:[%s377 + $0x2d8] sm:$0xff]
        %v746 = vld [vmem:[%s377 + $0x2e0] sm:$0xff]
        %v747 = vld [vmem:[%s377 + $0x2e8] sm:$0xff]
        %v748 = vld [vmem:[%s377 + $0x2f0] sm:$0xff]
        %v749 = vld [vmem:[%s377 + $0x2f8] sm:$0xff]
        %750 = vmatprep.subr.mxu0 %v655
        %751 = vmatpush1.msra.mxu0 %v654
        %752 = vmatprep.subr.mxu0 %v658
        %753 = vmatpush1.msra.mxu0 %v657
        %754 = vmatprep.subr.mxu0 %v661
        %755 = vmatpush1.msra.mxu0 %v660
        %756 = vmatprep.subr.mxu0 %v664
        %757 = vmatpush1.msra.mxu0 %v663
        %758 = vmatprep.subr.mxu0 %v667
        %759 = vmatpush1.msra.mxu0 %v666
        %760 = vmatprep.subr.mxu0 %v670
        %761 = vmatpush1.msra.mxu0 %v669
        %762 = vmatprep.subr.mxu0 %v673
        %763 = vmatpush1.msra.mxu0 %v672
        %764 = vmatprep.subr.mxu0 %v676
        %765 = vmatpush1.msra.mxu0 %v675
        %766 = vmatprep.subr.mxu0 %v679
        %767 = vmatpush1.msra.mxu0 %v678
        %768 = vmatprep.subr.mxu0 %v682
        %769 = vmatpush1.msra.mxu0 %v681
        %770 = vmatprep.subr.mxu0 %v685
        %771 = vmatpush1.msra.mxu0 %v684
        %772 = vmatprep.subr.mxu0 %v688
        %773 = vmatpush1.msra.mxu0 %v687
        %774 = vmatprep.subr.mxu0 %v691
        %775 = vmatpush1.msra.mxu0 %v690
        %776 = vmatprep.subr.mxu0 %v694
        %777 = vmatpush1.msra.mxu0 %v693
        %778 = vmatprep.subr.mxu0 %v697
        %779 = vmatpush1.msra.mxu0 %v696
        %780 = vmatprep.subr.mxu0 %v700
        %781 = vmatpush1.msra.mxu0 %v699
        %782 = vmatprep.subr.mxu0 %v703
        %783 = vmatpush1.msra.mxu0 %v702
        %784 = vmatprep.subr.mxu0 %v706
        %785 = vmatpush1.msra.mxu0 %v705
        %786 = vmatprep.subr.mxu0 %v709
        %787 = vmatpush1.msra.mxu0 %v708
        %788 = vmatprep.subr.mxu0 %v712
        %789 = vmatpush1.msra.mxu0 %v711
        %790 = vmatprep.subr.mxu0 %v715
        %791 = vmatpush1.msra.mxu0 %v714
        %792 = vmatprep.subr.mxu0 %v718
        %793 = vmatpush1.msra.mxu0 %v717
        %794 = vmatprep.subr.mxu0 %v721
        %795 = vmatpush1.msra.mxu0 %v720
        %796 = vmatprep.subr.mxu0 %v724
        %797 = vmatpush1.msra.mxu0 %v723
        %798 = vmatprep.subr.mxu0 %v727
        %799 = vmatpush1.msra.mxu0 %v726
        %800 = vmatprep.subr.mxu0 %v730
        %801 = vmatpush1.msra.mxu0 %v729
        %802 = vmatprep.subr.mxu0 %v733
        %803 = vmatpush1.msra.mxu0 %v732
        %804 = vmatprep.subr.mxu0 %v736
        %805 = vmatpush1.msra.mxu0 %v735
        %806 = vmatprep.subr.mxu0 %v739
        %807 = vmatpush1.msra.mxu0 %v738
        %808 = vmatprep.subr.mxu0 %v742
        %809 = vmatpush1.msra.mxu0 %v741
        %810 = vmatprep.subr.mxu0 %v745
        %811 = vmatpush1.msra.mxu0 %v744
        %812 = vmatprep.subr.mxu0 %v748
        %813 = vmatpush1.msra.mxu0 %v747
        %814 = vmatprep.mubr.f32.mxu0 %v651
        %815 = vmatmul.mubr.f32.gmra.mrb[0].mxu0 %v650
        %v816 = vpop.f32.mrb[0].mxu0
        %v817 = vadd.f32 0.0, %v816
        %v818 = vpop.f32.mrb[0].mxu0
        %v819 = vadd.f32 0.0, %v818
        %820 = vmatprep.mubr.f32.mxu0 %v653
        %821 = vmatmul.mubr.f32.gmra.mrb[0].mxu0 %v652
        %v822 = vpop.f32.mrb[0].mxu0
        %v823 = vadd.f32 0.0, %v822
        %v824 = vpop.f32.mrb[0].mxu0
        %v825 = vadd.f32 0.0, %v824
        %826 = vdwg.mxu0
        %827 = vmatprep.subr.mxu0 0.0
        %828 = vmatpush1.msra.mxu0 %v656
        %829 = vmatprep.subr.mxu0 0.0
        %830 = vmatpush1.msra.mxu0 %v659
        %831 = vmatprep.subr.mxu0 0.0
        %832 = vmatpush1.msra.mxu0 %v662
        %833 = vmatprep.subr.mxu0 0.0
        %834 = vmatpush1.msra.mxu0 %v665
        %835 = vmatprep.subr.mxu0 0.0
        %836 = vmatpush1.msra.mxu0 %v668
        %837 = vmatprep.subr.mxu0 0.0
        %838 = vmatpush1.msra.mxu0 %v671
        %839 = vmatprep.subr.mxu0 0.0
        %840 = vmatpush1.msra.mxu0 %v674
        %841 = vmatprep.subr.mxu0 0.0
        %842 = vmatpush1.msra.mxu0 %v677
        %843 = vmatprep.subr.mxu0 0.0
        %844 = vmatpush1.msra.mxu0 %v680
        %845 = vmatprep.subr.mxu0 0.0
        %846 = vmatpush1.msra.mxu0 %v683
        %847 = vmatprep.subr.mxu0 0.0
        %848 = vmatpush1.msra.mxu0 %v686
        %849 = vmatprep.subr.mxu0 0.0
        %850 = vmatpush1.msra.mxu0 %v689
        %851 = vmatprep.subr.mxu0 0.0
        %852 = vmatpush1.msra.mxu0 %v692
        %853 = vmatprep.subr.mxu0 0.0
        %854 = vmatpush1.msra.mxu0 %v695
        %855 = vmatprep.subr.mxu0 0.0
        %856 = vmatpush1.msra.mxu0 %v698
        %857 = vmatprep.subr.mxu0 0.0
        %858 = vmatpush1.msra.mxu0 %v701
        %859 = vmatprep.subr.mxu0 0.0
        %860 = vmatpush1.msra.mxu0 %v704
        %861 = vmatprep.subr.mxu0 0.0
        %862 = vmatpush1.msra.mxu0 %v707
        %863 = vmatprep.subr.mxu0 0.0
        %864 = vmatpush1.msra.mxu0 %v710
        %865 = vmatprep.subr.mxu0 0.0
        %866 = vmatpush1.msra.mxu0 %v713
        %867 = vmatprep.subr.mxu0 0.0
        %868 = vmatpush1.msra.mxu0 %v716
        %869 = vmatprep.subr.mxu0 0.0
        %870 = vmatpush1.msra.mxu0 %v719
        %871 = vmatprep.subr.mxu0 0.0
        %872 = vmatpush1.msra.mxu0 %v722
        %873 = vmatprep.subr.mxu0 0.0
        %874 = vmatpush1.msra.mxu0 %v725
        %875 = vmatprep.subr.mxu0 0.0
        %876 = vmatpush1.msra.mxu0 %v728
        %877 = vmatprep.subr.mxu0 0.0
        %878 = vmatpush1.msra.mxu0 %v731
        %879 = vmatprep.subr.mxu0 0.0
        %880 = vmatpush1.msra.mxu0 %v734
        %881 = vmatprep.subr.mxu0 0.0
        %882 = vmatpush1.msra.mxu0 %v737
        %883 = vmatprep.subr.mxu0 0.0
        %884 = vmatpush1.msra.mxu0 %v740
        %885 = vmatprep.subr.mxu0 0.0
        %886 = vmatpush1.msra.mxu0 %v743
        %887 = vmatprep.subr.mxu0 0.0
        %888 = vmatpush1.msra.mxu0 %v746
        %889 = vmatprep.subr.mxu0 0.0
        %890 = vmatpush1.msra.mxu0 %v749
        %891 = vmatprep.mubr.f32.mxu0 %v651
        %892 = vmatmul.mubr.f32.gmra.mrb[0].mxu0 %v650
        %v893 = vpop.f32.mrb[0].mxu0
        %v894 = vadd.f32 0.0, %v893
        %v895 = vpop.f32.mrb[0].mxu0
        %896 = vmatprep.mubr.f32.mxu0 %v653
        %897 = vmatmul.mubr.f32.gmra.mrb[0].mxu0 %v652
        %v898 = vpop.f32.mrb[0].mxu0
        %v899 = vadd.f32 0.0, %v898
        %v900 = vpop.f32.mrb[0].mxu0
        %901 = vdwg.mxu0
        %v902 = vadd.f32 %v565, %v817
        %v903 = vadd.f32 %v567, %v819
        %v904 = vadd.f32 %v571, %v823
        %v905 = vadd.f32 %v573, %v825
        %v906 = vxor.u32 %v902, 2147483648
        %v907 = vxor.u32 %v903, 2147483648
        %v908 = vxor.u32 %v904, 2147483648
        %v909 = vxor.u32 %v905, 2147483648
        %v910 = vmul.f32 %v906, 1.442695
        %v911 = vpow.pop %v910
        %v912 = vmul.f32 %v907, 1.442695
        %v913 = vpow.pop %v912
        %v914 = vmul.f32 %v908, 1.442695
        %v915 = vpow.pop %v914
        %v916 = vmul.f32 %v909, 1.442695
        %v917 = vpow.pop %v916
        %v918 = vadd.f32 %v911, 1.0
        %v919 = vadd.f32 %v913, 1.0
        %v920 = vadd.f32 %v915, 1.0
        %v921 = vadd.f32 %v917, 1.0
        %v922 = vrcp.pop %v918
        %v923 = vmul.f32 1.0, %v922
        %v924 = vrcp.pop %v919
        %v925 = vmul.f32 1.0, %v924
        %v926 = vrcp.pop %v920
        %v927 = vmul.f32 1.0, %v926
        %v928 = vrcp.pop %v921
        %v929 = vmul.f32 1.0, %v928
        %v930 = vmul.f32 %v923, %v894
        %v931 = vmul.f32 %v927, %v899
        %v932 = vadd.f32 %v642, %v930
        %v933 = vadd.f32 %v647, %v931
        %v934 = vtanh.pop %v932
        %v935 = vtanh.pop %v933
        %v936 = vld [vmem:[%s359] sm:$0xff]
        %v937 = vld [vmem:[%s359 + $0x8] sm:$0xff]
        %v938 = vsub.f32 %v936, %v934
        %v939 = vsub.f32 %v937, %v935
        %v940 = vmul.f32 %v925, %v938
        %v941 = vmul.f32 %v929, %v939
        %v942 = vadd.f32 %v934, %v940
        %v943 = vadd.f32 %v935, %v941
        %944 = vst [vmem:[%s419] sm:$0xff] %v942
        %945 = vst [vmem:[%s419 + $0x8] sm:$0xff] %v943
        %s946 = sand.u32 %s202, 1
        %s947 = scalar_lea.sflag [#allocation4], %s946
        %s948 = sand.u32 %s202, 1
        %s949 = smul.addr %s948, 16
        %s950 = scalar_lea.vmem [#allocation10], %s949
        // Predicated region
        $region65: #{tpu_custom_call.1} parent=43 // pred_check
          %p951 = pneg %p212
        $region66: #{tpu_custom_call.1} parent=43 // pred_check_branch
          %953 = sbr.rel (%p951) target = $region68
        $region67: #{tpu_custom_call.1} parent=43 // pred_region
          %s954 = smul.u32 2, %s26
          %s956 = ssub.s32 256, 256
          %957 = vsyncadd %s947, %s956
          %s958 = smul.addr %s954, 2
          %s959 = sadd.s32 %s27, %s958
          %s960 = smul.addr %s959, 128
          %s961 = scalar_lea.hbm %s6, %s960
          %s962 = sshll.u32 %s950, 4
          %s963 = int_to_ptr.vmem [resolvable:$true] %s962
          %968 = dma.vmem_to_hbm [thread:$0]  %s963, 256, %s961, %s947, 128, 256, 8
        $region68: #{tpu_custom_call.1} parent=43 // pred_fallthru
          _
      $region44: #{tpu_custom_call.1} parent=5 // pred_fallthru
        _
      %p969 = scmp.le.s32.totalorder 2, %s17
      // Predicated region
      $region69: #{tpu_custom_call.1} parent=5 // pred_check
        %p970 = pneg %p969
      $region70: #{tpu_custom_call.1} parent=5 // pred_check_branch
        %972 = sbr.rel (%p970) target = $region72
      $region71: #{tpu_custom_call.1} parent=5 // pred_region
        %s973 = ssub.s32 %s17, 2
        // Predicated region
        $region73: #{tpu_custom_call.1} parent=71 // pred_check
          %p974 = pneg %p218
        $region74: #{tpu_custom_call.1} parent=71 // pred_check_branch
          %976 = sbr.rel (%p974) target = $region76
        $region75: #{tpu_custom_call.1} parent=71 // pred_region
          %s977 = sand.u32 %s203, 1
          %s978 = scalar_lea.sflag [#allocation4], %s977
          %s979 = sand.u32 %s203, 1
          %s980 = smul.addr %s979, 16
          %s981 = scalar_lea.vmem [#allocation10], %s980
          %982 = dma.done %s978, 256
        $region76: #{tpu_custom_call.1} parent=71 // pred_fallthru
          _
      $region72: #{tpu_custom_call.1} parent=5 // pred_fallthru
        _
    $region6: #{tpu_custom_call.1} parent=1 // loop_footer
      %s21 = sadd.s32 1, %s17
    $region7: #{tpu_custom_call.1} parent=1 // loop_footer_branch
      %16 = sbr.rel target = $region3
    $region8: #{tpu_custom_call.1} parent=1 // loop_exit
      _
    %983 = vsyncpa [#allocation3], 1
    %s984 = scalar_lea.sflag [#allocation3], 1
    %985 = vsyncpa %s984, 1
    %986 = vsyncpa [#allocation6], 1
    %987 = vsyncpa [#allocation4], 1
    %s988 = scalar_lea.sflag [#allocation4], 1
    %989 = vsyncpa %s988, 1

</llo_original>
